<compile_context>
chip_gen: v6e
topology: v6e:2x2x1
jax: 0.10.0
libtpu: 0.0.40
codegen_flags: <defaults>
</compile_context>

<pallas_src>
import functools

import jax
import jax.numpy as jnp
from jax.experimental import pallas as pl
from jax.experimental.pallas import tpu as pltpu


def _gram_mse_kernel(inv_norm, inv_nelem, f_ref, tgt_ref, g_ref, loss_ref, acc_ref):
    """One step over the K (= c*d) reduction axis.

    f_ref:    (M, tile_k) VMEM -- one K slab of the flattened feature map
    tgt_ref:  (M, M)      VMEM -- target Gram matrix (constant across steps)
    g_ref:    (M, M)      VMEM -- output Gram matrix of the input
    loss_ref: (1, 1)      VMEM -- output MSE(G, target)
    acc_ref:  (M, M) f32  VMEM scratch accumulator
    """
    k = pl.program_id(0)

    @pl.when(k == 0)
    def _init():
        acc_ref[...] = jnp.zeros_like(acc_ref)

    f = f_ref[...].astype(jnp.float32)
    # F @ F.T over this K slab on the MXU, accumulated in exact f32.
    acc_ref[...] += jax.lax.dot_general(
        f, f,
        dimension_numbers=(((1,), (1,)), ((), ())),
        precision=jax.lax.Precision.HIGHEST,
        preferred_element_type=jnp.float32,
    )

    @pl.when(k == pl.num_programs(0) - 1)
    def _finalize():
        g = acc_ref[...] * inv_norm          # multiply by 1/(a*b*c*d), no divide
        g_ref[...] = g.astype(g_ref.dtype)
        d = g - tgt_ref[...]
        loss_ref[...] = jnp.sum(d * d, keepdims=True) * inv_nelem


def _choose_tile_k(m, k, *, target_block_bytes=4 << 20, max_tile=16384):
    """Lane tile: multiple of 128, ~4 MiB f32 slab (<=8 MiB double-buffered)."""
    k_rounded = ((k + 127) // 128) * 128
    tk = target_block_bytes // (max(m, 8) * 4)
    tk = max(128, min(max_tile, (tk // 128) * 128))
    return min(tk, k_rounded)


def _gram_and_mse(features, target_gram, *, tile_k=None):
    """features: (M, K); target_gram: (M, M). Returns (G, mse(G, target))."""
    m, k = features.shape
    inv_norm = 1.0 / float(m * k)      # 1 / (a*b*c*d) — uses the ORIGINAL K
    inv_nelem = 1.0 / float(m * m)     # MSE denominator

    tk = _choose_tile_k(m, k) if tile_k is None else tile_k
    k_padded = pl.cdiv(k, tk) * tk
    if k_padded != k:
        # Zero padding of the lane axis does not change F @ F.T.
        features = jnp.pad(features, ((0, 0), (0, k_padded - k)))
    grid = (k_padded // tk,)

    kernel = functools.partial(_gram_mse_kernel, inv_norm, inv_nelem)

    g, loss = pl.pallas_call(
        kernel,
        out_shape=(
            jax.ShapeDtypeStruct((m, m), jnp.float32),
            jax.ShapeDtypeStruct((1, 1), jnp.float32),
        ),
        grid_spec=pltpu.PrefetchScalarGridSpec(
            num_scalar_prefetch=0,
            grid=grid,
            in_specs=[
                pl.BlockSpec((m, tk), lambda j: (0, j)),   # K slab of features
                pl.BlockSpec((m, m), lambda j: (0, 0)),    # target Gram (resident)
            ],
            out_specs=[
                pl.BlockSpec((m, m), lambda j: (0, 0)),
                pl.BlockSpec((1, 1), lambda j: (0, 0)),
            ],
            scratch_shapes=[pltpu.VMEM((m, m), jnp.float32)],
        ),
        compiler_params=pltpu.CompilerParams(
            # K is a reduction axis (accumulator carried across steps).
            dimension_semantics=("arbitrary",),
        ),
        cost_estimate=pl.CostEstimate(
            flops=2 * m * m * k_padded,
            bytes_accessed=m * k_padded * 4 + 3 * m * m * 4 + 4,
            transcendentals=0,
        ),
    )(features, target_gram)
    return g, loss[0, 0]


def gram_matrix(x, *, tile_k=None):
    """Pallas equivalent of the PyTorch gram_matrix: (F @ F.T) / (a*b*c*d)."""
    a, b, c, d = x.shape
    features = x.reshape(a * b, c * d)
    zeros = jnp.zeros((a * b, a * b), jnp.float32)
    g, _ = _gram_and_mse(features, zeros, tile_k=tile_k)
    return g


class StyleLoss:
    """Pallas/JAX version of the PyTorch StyleLoss module (forward pass)."""

    def __init__(self, target_feature):
        # `.detach()` equivalent: no gradient flows through the target Gram.
        self.target = jax.lax.stop_gradient(gram_matrix(target_feature))
        self.loss = None

    def __call__(self, x):
        a, b, c, d = x.shape
        features = x.reshape(a * b, c * d)
        _, self.loss = _gram_and_mse(features, self.target)
        return x  # forward returns the input unchanged


if __name__ == "__main__":
    key = jax.random.PRNGKey(0)
    k1, k2 = jax.random.split(key)

    # Small NCHW feature maps: a=2 batch, b=4 channels, 16x16 spatial.
    N, C, H, W = 2, 4, 16, 16
    target_feature = jax.random.uniform(k1, (N, C, H, W), dtype=jnp.float32)
    input_feature = jax.random.uniform(k2, (N, C, H, W), dtype=jnp.float32)

    module = StyleLoss(target_feature)
    out = module(input_feature)
    out = jax.block_until_ready(out)
    loss = jax.block_until_ready(module.loss)
    target = jax.block_until_ready(module.target)

    # Pure-JAX reference (same math as the PyTorch module), f32-exact matmul.
    def ref_gram(x):
        a, b, c, d = x.shape
        f = x.reshape(a * b, c * d)
        g = jnp.dot(f, f.T, precision=jax.lax.Precision.HIGHEST)
        return g / (a * b * c * d)

    ref_target = ref_gram(target_feature)
    ref_loss = jnp.mean((ref_gram(input_feature) - ref_target) ** 2)

    assert out.shape == input_feature.shape
    assert bool(jnp.array_equal(out, input_feature))        # forward passes input through
    assert jnp.allclose(target, ref_target, atol=1e-5, rtol=1e-4)
    assert jnp.allclose(loss, ref_loss, atol=1e-8, rtol=1e-3)

    print("KERNEL_OK")
</pallas_src>

<mosaic_0001>
module attributes {stable_mosaic.version = 11 : i64} {
  func.func @_gram_mse_kernel(%arg0: i32, %arg1: memref<8x256xf32, #tpu.memory_space<vmem>>, %arg2: memref<8x8xf32, #tpu.memory_space<vmem>>, %arg3: memref<8x8xf32, #tpu.memory_space<vmem>>, %arg4: memref<1x1xf32, #tpu.memory_space<vmem>>, %arg5: memref<8x8xf32, #tpu.memory_space<vmem>>) attributes {dimension_semantics = [#tpu.dimension_semantics<arbitrary>], iteration_bounds = array<i64: 1>, scalar_prefetch = 0 : i64, scratch_operands = 1 : i64, tpu.core_type = #tpu.core_type<tc>, window_params = [{transform_indices = @transform_0, window_bounds = array<i64: 8, 256>}, {pipeline_mode = #tpu.pipeline_mode<synchronous>, transform_indices = @transform_1, window_bounds = array<i64: 8, 8>}, {pipeline_mode = #tpu.pipeline_mode<synchronous>, transform_indices = @transform_2, window_bounds = array<i64: 8, 8>}, {pipeline_mode = #tpu.pipeline_mode<synchronous>, transform_indices = @transform_3, window_bounds = array<i64: 1, 1>}]} {
    %c0_i32 = arith.constant 0 : i32
    %0 = arith.cmpi eq, %arg0, %c0_i32 : i32
    %1 = arith.extui %0 : i1 to i32
    %c0_i32_0 = arith.constant 0 : i32
    %2 = arith.cmpi ne, %1, %c0_i32_0 : i32
    scf.if %2 {
      %cst_8 = arith.constant 0.000000e+00 : f32
      %11 = vector.broadcast %cst_8 : f32 to vector<8x8xf32>
      %c0_9 = arith.constant 0 : index
      %c0_10 = arith.constant 0 : index
      %12 = vector.load %arg5[%c0_9, %c0_10] : memref<8x8xf32, #tpu.memory_space<vmem>>, vector<8x8xf32>
      tpu.vector_store %arg5[%c0_9, %c0_10], %11 {strides = array<i32>} : memref<8x8xf32, #tpu.memory_space<vmem>>, vector<8x8xf32>,
    } else {
    }
    %c0 = arith.constant 0 : index
    %c0_1 = arith.constant 0 : index
    %3 = vector.load %arg1[%c0, %c0_1] : memref<8x256xf32, #tpu.memory_space<vmem>>, vector<8x256xf32>
    %c0_2 = arith.constant 0 : index
    %c0_3 = arith.constant 0 : index
    %4 = vector.load %arg5[%c0_2, %c0_3] : memref<8x8xf32, #tpu.memory_space<vmem>>, vector<8x8xf32>
    %cst = arith.constant dense<0.000000e+00> : vector<8x8xf32>
    %5 = tpu.matmul %3, %3, %cst {dimension_numbers = #tpu.dot_dimension_numbers<[1], [1], [0], [0], [0, 0, 1, 0], [], []>, precision = #tpu.contract_precision<fp32>} : vector<8x256xf32>, vector<8x256xf32>, vector<8x8xf32> -> vector<8x8xf32>
    %6 = arith.addf %4, %5 : vector<8x8xf32>
    %c0_4 = arith.constant 0 : index
    %c0_5 = arith.constant 0 : index
    %7 = vector.load %arg5[%c0_4, %c0_5] : memref<8x8xf32, #tpu.memory_space<vmem>>, vector<8x8xf32>
    tpu.vector_store %arg5[%c0_4, %c0_5], %6 {strides = array<i32>} : memref<8x8xf32, #tpu.memory_space<vmem>>, vector<8x8xf32>,
    %c0_i32_6 = arith.constant 0 : i32
    %8 = arith.cmpi eq, %arg0, %c0_i32_6 : i32
    %9 = arith.extui %8 : i1 to i32
    %c0_i32_7 = arith.constant 0 : i32
    %10 = arith.cmpi ne, %9, %c0_i32_7 : i32
    scf.if %10 {
      %c0_8 = arith.constant 0 : index
      %c0_9 = arith.constant 0 : index
      %11 = vector.load %arg5[%c0_8, %c0_9] : memref<8x8xf32, #tpu.memory_space<vmem>>, vector<8x8xf32>
      %cst_10 = arith.constant 4.8828125E-4 : f32
      %12 = vector.broadcast %cst_10 : f32 to vector<8x8xf32>
      %13 = arith.mulf %11, %12 : vector<8x8xf32>
      %c0_11 = arith.constant 0 : index
      %c0_12 = arith.constant 0 : index
      %14 = vector.load %arg3[%c0_11, %c0_12] : memref<8x8xf32, #tpu.memory_space<vmem>>, vector<8x8xf32>
      tpu.vector_store %arg3[%c0_11, %c0_12], %13 {strides = array<i32>} : memref<8x8xf32, #tpu.memory_space<vmem>>, vector<8x8xf32>,
      %c0_13 = arith.constant 0 : index
      %c0_14 = arith.constant 0 : index
      %15 = vector.load %arg2[%c0_13, %c0_14] : memref<8x8xf32, #tpu.memory_space<vmem>>, vector<8x8xf32>
      %16 = arith.subf %13, %15 : vector<8x8xf32>
      %17 = arith.mulf %16, %16 : vector<8x8xf32>
      %18 = vector.shape_cast %17 : vector<8x8xf32> to vector<1x8x8xf32>
      %cst_15 = arith.constant dense<0.000000e+00> : vector<1xf32>
      %19 = vector.multi_reduction <add>, %18, %cst_15 [1, 2] : vector<1x8x8xf32> to vector<1xf32>
      %20 = vector.shape_cast %19 : vector<1xf32> to vector<1x1x1xf32>
      %21 = vector.extract %20[0, 0, 0] : f32 from vector<1x1x1xf32>
      %22 = vector.broadcast %21 : f32 to vector<1x1xf32>
      %cst_16 = arith.constant 1.562500e-02 : f32
      %23 = vector.broadcast %cst_16 : f32 to vector<1x1xf32>
      %24 = arith.mulf %22, %23 : vector<1x1xf32>
      %c0_17 = arith.constant 0 : index
      %c0_18 = arith.constant 0 : index
      %25 = vector.load %arg4[%c0_17, %c0_18] : memref<1x1xf32, #tpu.memory_space<vmem>>, vector<1x1xf32>
      tpu.vector_store %arg4[%c0_17, %c0_18], %24 {strides = array<i32>} : memref<1x1xf32, #tpu.memory_space<vmem>>, vector<1x1xf32>,
    } else {
    }
    return
  }
  func.func @transform_0(%arg0: i32) -> (i32, i32) {
    %c0_i32 = arith.constant 0 : i32
    %c0_i32_0 = arith.constant 0 : i32
    return %c0_i32, %arg0 : i32, i32
  }
  func.func @transform_1(%arg0: i32) -> (i32, i32) {
    %c0_i32 = arith.constant 0 : i32
    %c0_i32_0 = arith.constant 0 : i32
    %c0_i32_1 = arith.constant 0 : i32
    return %c0_i32, %c0_i32_0 : i32, i32
  }
  func.func @transform_2(%arg0: i32) -> (i32, i32) {
    %c0_i32 = arith.constant 0 : i32
    %c0_i32_0 = arith.constant 0 : i32
    %c0_i32_1 = arith.constant 0 : i32
    return %c0_i32, %c0_i32_0 : i32, i32
  }
  func.func @transform_3(%arg0: i32) -> (i32, i32) {
    %c0_i32 = arith.constant 0 : i32
    %c0_i32_0 = arith.constant 0 : i32
    %c0_i32_1 = arith.constant 0 : i32
    return %c0_i32, %c0_i32_0 : i32, i32
  }
}

</mosaic_0001>

<llo_original>
// kernel: tpu_custom_call.1
$region0: #{tpu_custom_call.1}
  #allocation0 [shape = 'u32[]', space=smem, size = 0x4, offset = 0x4, fixed_abs, tag = 'smem constant byte address 0x4 - core index']
  #allocation1 [shape = 'u32[144,128]{1,0:T(1,128)}', space=vmem, size = 0x12000, scoped, tag = 'internal scratch']
  #allocation2 [shape = 'f32[8,8]{1,0:T(8,128)}', space=vmem, size = 0x1000, scoped, tag = 'scratch operand']
  %s0 = inlined_call_operand.hbm [shape: f32[8,256], index: 0, kind: input, shape index: {}]
  %s1 = inlined_call_operand.hbm [shape: f32[8,8], index: 1, kind: input, shape index: {}]
  %s2 = inlined_call_operand.hbm [shape: f32[8,8], index: 2, kind: output, shape index: {0}]
  %s3 = inlined_call_operand.hbm [shape: f32[1,1], index: 3, kind: output, shape index: {1}]
  %4 = xla_tuple %s2, %s3
  %s5 = sld [smem:[#allocation0]]
  $region42: #{tpu_custom_call.1} parent=0
    _
  %s7 = ssub.s32 1, %s5
  %s8 = scalar_select 0, %s7, %s5
  $region1: #{tpu_custom_call.1} parent=0
    #allocation3 [shape = 'u8[8192]{0}', space=vmem, size = 0x2000, scoped, tag = 'input window, operand 0, single buffered']
    #allocation4 [shape = 's32[1]{0}', space=sflag, size = 0x4, scoped, tag = 'scoped memory for tpu_custom_call.1']
    #allocation5 [shape = 's32[1]{0}', space=sflag, size = 0x4, scoped, tag = 'scoped memory for tpu_custom_call.1']
    #allocation6 [shape = 'u8[4096]{0}', space=vmem, size = 0x1000, scoped, tag = 'input window, operand 1, single buffered']
    #allocation7 [shape = 's32[1]{0}', space=sflag, size = 0x4, scoped, tag = 'scoped memory for tpu_custom_call.1']
    #allocation8 [shape = 'u8[4096]{0}', space=vmem, size = 0x1000, scoped, tag = 'output window, operand 0, single buffered']
    #allocation9 [shape = 'u8[512]{0}', space=vmem, size = 0x400, scoped, tag = 'output window, operand 1, single buffered']
    #allocation10 [shape = 's32[1]{0}', space=sflag, size = 0x4, scoped, tag = 'scoped memory for tpu_custom_call.1']
    %9 = vsyncpa [#allocation4], 0
    %10 = vsyncpa [#allocation7], 0
    %11 = vsyncpa [#allocation5], 0
    %12 = vsyncpa [#allocation10], 0
    // Predicated region
    $region2: #{tpu_custom_call.1} parent=1 // pred_check
      _
    $region3: #{tpu_custom_call.1} parent=1 // pred_check_branch
      %14 = sbr.rel (0) target = $region5
    $region4: #{tpu_custom_call.1} parent=1 // pred_region
      %s16 = ssub.s32 256, 256
      %17 = vsyncadd [#allocation4], %s16
      %s19 = sshll.u32 [#allocation3], 4
      %s20 = int_to_ptr.vmem [resolvable:$true] %s19
      %22 = dma.hbm_to_vmem [thread:$0]  %s0, 256, %s20, [#allocation4]
    $region5: #{tpu_custom_call.1} parent=1 // pred_fallthru
      _
    // Predicated region
    $region6: #{tpu_custom_call.1} parent=1 // pred_check
      _
    $region7: #{tpu_custom_call.1} parent=1 // pred_check_branch
      %24 = sbr.rel (0) target = $region9
    $region8: #{tpu_custom_call.1} parent=1 // pred_region
      %s26 = ssub.s32 128, 128
      %27 = vsyncadd [#allocation7], %s26
      %s29 = sshll.u32 [#allocation6], 4
      %s30 = int_to_ptr.vmem [resolvable:$true] %s29
      %32 = dma.hbm_to_vmem [thread:$0]  %s1, 128, %s30, [#allocation7]
    $region9: #{tpu_custom_call.1} parent=1 // pred_fallthru
      _
    // Predicated region
    $region10: #{tpu_custom_call.1} parent=1 // pred_check
      _
    $region11: #{tpu_custom_call.1} parent=1 // pred_check_branch
      %34 = sbr.rel (0) target = $region13
    $region12: #{tpu_custom_call.1} parent=1 // pred_region
      %35 = dma.done [#allocation4], 256
    $region13: #{tpu_custom_call.1} parent=1 // pred_fallthru
      _
    // Predicated region
    $region14: #{tpu_custom_call.1} parent=1 // pred_check
      _
    $region15: #{tpu_custom_call.1} parent=1 // pred_check_branch
      %37 = sbr.rel (0) target = $region17
    $region16: #{tpu_custom_call.1} parent=1 // pred_region
      %38 = dma.done [#allocation7], 128
    $region17: #{tpu_custom_call.1} parent=1 // pred_fallthru
      _
    %p39 = scmp.eq.s32.totalorder 0, 0
    // Predicated region
    $region18: #{tpu_custom_call.1} parent=1 // pred_check
      %p40 = pneg %p39
    $region19: #{tpu_custom_call.1} parent=1 // pred_check_branch
      %42 = sbr.rel (%p40) target = $region21
    $region20: #{tpu_custom_call.1} parent=1 // pred_region
      %vm43 = vcmask 64512
      %44 = vst.msk [vmem:[#allocation2] sm:$0xff] %vm43, 0.0
    $region21: #{tpu_custom_call.1} parent=1 // pred_fallthru
      _
    %v45 = vld [vmem:[#allocation3] sm:$0xff]
    %v46 = vld [vmem:[#allocation3 + $0x8] sm:$0xff]
    %v47 = vld [vmem:[#allocation2] sm:$0xff]
    %48 = vmatprep.subr.mxu0 0.0
    %49 = vmatpush1.xpose.msra.mxu0 0.0
    %50 = vmatprep.subr.mxu0 0.0
    %51 = vmatpush1.xpose.msra.mxu0 0.0
    %52 = vmatprep.subr.mxu0 0.0
    %53 = vmatpush1.xpose.msra.mxu0 0.0
    %54 = vmatprep.subr.mxu0 0.0
    %55 = vmatpush1.xpose.msra.mxu0 0.0
    %56 = vmatprep.subr.mxu0 0.0
    %57 = vmatpush1.xpose.msra.mxu0 0.0
    %58 = vmatprep.subr.mxu0 0.0
    %59 = vmatpush1.xpose.msra.mxu0 0.0
    %60 = vmatprep.subr.mxu0 0.0
    %61 = vmatpush1.xpose.msra.mxu0 0.0
    %62 = vmatprep.subr.mxu0 0.0
    %63 = vmatpush1.xpose.msra.mxu0 0.0
    %64 = vmatprep.subr.mxu0 0.0
    %65 = vmatpush1.xpose.msra.mxu0 0.0
    %66 = vmatprep.subr.mxu0 0.0
    %67 = vmatpush1.xpose.msra.mxu0 0.0
    %68 = vmatprep.subr.mxu0 0.0
    %69 = vmatpush1.xpose.msra.mxu0 0.0
    %70 = vmatprep.subr.mxu0 0.0
    %71 = vmatpush1.xpose.msra.mxu0 0.0
    %72 = vmatprep.subr.mxu0 0.0
    %73 = vmatpush1.xpose.msra.mxu0 0.0
    %74 = vmatprep.subr.mxu0 0.0
    %75 = vmatpush1.xpose.msra.mxu0 0.0
    %76 = vmatprep.subr.mxu0 0.0
    %77 = vmatpush1.xpose.msra.mxu0 0.0
    %v78 = vand.u32 %v46, 4294901760
    %79 = vmatprep.subr.mxu0 %v78
    %v80 = vand.u32 %v45, 4294901760
    %81 = vmatpush1.xpose.msra.mxu0 %v80
    %82 = vmatprep.subr.mxu0 0.0
    %83 = vmatpush2.xpose.msra.mxu0 0.0
    %84 = vmatprep.subr.mxu0 0.0
    %85 = vmatpush2.xpose.msra.mxu0 0.0
    %86 = vmatprep.subr.mxu0 0.0
    %87 = vmatpush2.xpose.msra.mxu0 0.0
    %88 = vmatprep.subr.mxu0 0.0
    %89 = vmatpush2.xpose.msra.mxu0 0.0
    %90 = vmatprep.subr.mxu0 0.0
    %91 = vmatpush2.xpose.msra.mxu0 0.0
    %92 = vmatprep.subr.mxu0 0.0
    %93 = vmatpush2.xpose.msra.mxu0 0.0
    %94 = vmatprep.subr.mxu0 0.0
    %95 = vmatpush2.xpose.msra.mxu0 0.0
    %96 = vmatprep.subr.mxu0 0.0
    %97 = vmatpush2.xpose.msra.mxu0 0.0
    %98 = vmatprep.subr.mxu0 0.0
    %99 = vmatpush2.xpose.msra.mxu0 0.0
    %100 = vmatprep.subr.mxu0 0.0
    %101 = vmatpush2.xpose.msra.mxu0 0.0
    %102 = vmatprep.subr.mxu0 0.0
    %103 = vmatpush2.xpose.msra.mxu0 0.0
    %104 = vmatprep.subr.mxu0 0.0
    %105 = vmatpush2.xpose.msra.mxu0 0.0
    %106 = vmatprep.subr.mxu0 0.0
    %107 = vmatpush2.xpose.msra.mxu0 0.0
    %108 = vmatprep.subr.mxu0 0.0
    %109 = vmatpush2.xpose.msra.mxu0 0.0
    %110 = vmatprep.subr.mxu0 0.0
    %111 = vmatpush2.xpose.msra.mxu0 0.0
    %112 = vmatprep.subr.mxu0 0.0
    %113 = vmatpush2.xpose.msra.mxu0 0.0
    %v114 = vand.u32 %v46, 4294901760
    %v115 = vsub.f32 %v46, %v114
    %v116 = vand.u32 %v115, 4294901760
    %v117 = vsub.f32 %v115, %v116
    %v118 = vand.u32 %v117, 4294901760
    %119 = vmatprep.mubr.f32.mxu0 %v118
    %v120 = vand.u32 %v45, 4294901760
    %v121 = vsub.f32 %v45, %v120
    %v122 = vand.u32 %v121, 4294901760
    %v123 = vsub.f32 %v121, %v122
    %v124 = vand.u32 %v123, 4294901760
    %125 = vmatmul.mubr.f32.gmra.mxu0 %v124
    %v126 = vpop.f32.mrf.mxu0
    %v127 = vadd.f32 0.0, %v126
    %v128 = vpop.f32.mrf.mxu0
    %129 = vdwg.mxu0
    %130 = vmatprep.subr.mxu0 0.0
    %131 = vmatpush1.xpose.msra.mxu0 0.0
    %132 = vmatprep.subr.mxu0 0.0
    %133 = vmatpush1.xpose.msra.mxu0 0.0
    %134 = vmatprep.subr.mxu0 0.0
    %135 = vmatpush1.xpose.msra.mxu0 0.0
    %136 = vmatprep.subr.mxu0 0.0
    %137 = vmatpush1.xpose.msra.mxu0 0.0
    %138 = vmatprep.subr.mxu0 0.0
    %139 = vmatpush1.xpose.msra.mxu0 0.0
    %140 = vmatprep.subr.mxu0 0.0
    %141 = vmatpush1.xpose.msra.mxu0 0.0
    %142 = vmatprep.subr.mxu0 0.0
    %143 = vmatpush1.xpose.msra.mxu0 0.0
    %144 = vmatprep.subr.mxu0 0.0
    %145 = vmatpush1.xpose.msra.mxu0 0.0
    %146 = vmatprep.subr.mxu0 0.0
    %147 = vmatpush1.xpose.msra.mxu0 0.0
    %148 = vmatprep.subr.mxu0 0.0
    %149 = vmatpush1.xpose.msra.mxu0 0.0
    %150 = vmatprep.subr.mxu0 0.0
    %151 = vmatpush1.xpose.msra.mxu0 0.0
    %152 = vmatprep.subr.mxu0 0.0
    %153 = vmatpush1.xpose.msra.mxu0 0.0
    %154 = vmatprep.subr.mxu0 0.0
    %155 = vmatpush1.xpose.msra.mxu0 0.0
    %156 = vmatprep.subr.mxu0 0.0
    %157 = vmatpush1.xpose.msra.mxu0 0.0
    %158 = vmatprep.subr.mxu0 0.0
    %159 = vmatpush1.xpose.msra.mxu0 0.0
    %v160 = vand.u32 %v46, 4294901760
    %v161 = vsub.f32 %v46, %v160
    %v162 = vand.u32 %v161, 4294901760
    %v163 = vsub.f32 %v161, %v162
    %v164 = vand.u32 %v163, 4294901760
    %165 = vmatprep.subr.mxu0 %v164
    %v166 = vand.u32 %v45, 4294901760
    %v167 = vsub.f32 %v45, %v166
    %v168 = vand.u32 %v167, 4294901760
    %v169 = vsub.f32 %v167, %v168
    %v170 = vand.u32 %v169, 4294901760
    %171 = vmatpush1.xpose.msra.mxu0 %v170
    %172 = vmatprep.subr.mxu0 0.0
    %173 = vmatpush2.xpose.msra.mxu0 0.0
    %174 = vmatprep.subr.mxu0 0.0
    %175 = vmatpush2.xpose.msra.mxu0 0.0
    %176 = vmatprep.subr.mxu0 0.0
    %177 = vmatpush2.xpose.msra.mxu0 0.0
    %178 = vmatprep.subr.mxu0 0.0
    %179 = vmatpush2.xpose.msra.mxu0 0.0
    %180 = vmatprep.subr.mxu0 0.0
    %181 = vmatpush2.xpose.msra.mxu0 0.0
    %182 = vmatprep.subr.mxu0 0.0
    %183 = vmatpush2.xpose.msra.mxu0 0.0
    %184 = vmatprep.subr.mxu0 0.0
    %185 = vmatpush2.xpose.msra.mxu0 0.0
    %186 = vmatprep.subr.mxu0 0.0
    %187 = vmatpush2.xpose.msra.mxu0 0.0
    %188 = vmatprep.subr.mxu0 0.0
    %189 = vmatpush2.xpose.msra.mxu0 0.0
    %190 = vmatprep.subr.mxu0 0.0
    %191 = vmatpush2.xpose.msra.mxu0 0.0
    %192 = vmatprep.subr.mxu0 0.0
    %193 = vmatpush2.xpose.msra.mxu0 0.0
    %194 = vmatprep.subr.mxu0 0.0
    %195 = vmatpush2.xpose.msra.mxu0 0.0
    %196 = vmatprep.subr.mxu0 0.0
    %197 = vmatpush2.xpose.msra.mxu0 0.0
    %198 = vmatprep.subr.mxu0 0.0
    %199 = vmatpush2.xpose.msra.mxu0 0.0
    %200 = vmatprep.subr.mxu0 0.0
    %201 = vmatpush2.xpose.msra.mxu0 0.0
    %202 = vmatprep.subr.mxu0 0.0
    %203 = vmatpush2.xpose.msra.mxu0 0.0
    %v204 = vand.u32 %v46, 4294901760
    %205 = vmatprep.mubr.f32.mxu0 %v204
    %v206 = vand.u32 %v45, 4294901760
    %207 = vmatmul.mubr.f32.gmra.mxu0 %v206
    %v208 = vpop.f32.mrf.mxu0
    %v209 = vadd.f32 %v127, %v208
    %v210 = vpop.f32.mrf.mxu0
    %211 = vdwg.mxu0
    %212 = vmatprep.subr.mxu0 0.0
    %213 = vmatpush1.xpose.msra.mxu0 0.0
    %214 = vmatprep.subr.mxu0 0.0
    %215 = vmatpush1.xpose.msra.mxu0 0.0
    %216 = vmatprep.subr.mxu0 0.0
    %217 = vmatpush1.xpose.msra.mxu0 0.0
    %218 = vmatprep.subr.mxu0 0.0
    %219 = vmatpush1.xpose.msra.mxu0 0.0
    %220 = vmatprep.subr.mxu0 0.0
    %221 = vmatpush1.xpose.msra.mxu0 0.0
    %222 = vmatprep.subr.mxu0 0.0
    %223 = vmatpush1.xpose.msra.mxu0 0.0
    %224 = vmatprep.subr.mxu0 0.0
    %225 = vmatpush1.xpose.msra.mxu0 0.0
    %226 = vmatprep.subr.mxu0 0.0
    %227 = vmatpush1.xpose.msra.mxu0 0.0
    %228 = vmatprep.subr.mxu0 0.0
    %229 = vmatpush1.xpose.msra.mxu0 0.0
    %230 = vmatprep.subr.mxu0 0.0
    %231 = vmatpush1.xpose.msra.mxu0 0.0
    %232 = vmatprep.subr.mxu0 0.0
    %233 = vmatpush1.xpose.msra.mxu0 0.0
    %234 = vmatprep.subr.mxu0 0.0
    %235 = vmatpush1.xpose.msra.mxu0 0.0
    %236 = vmatprep.subr.mxu0 0.0
    %237 = vmatpush1.xpose.msra.mxu0 0.0
    %238 = vmatprep.subr.mxu0 0.0
    %239 = vmatpush1.xpose.msra.mxu0 0.0
    %240 = vmatprep.subr.mxu0 0.0
    %241 = vmatpush1.xpose.msra.mxu0 0.0
    %v242 = vand.u32 %v46, 4294901760
    %v243 = vsub.f32 %v46, %v242
    %244 = vmatprep.subr.mxu0 %v243
    %v245 = vand.u32 %v45, 4294901760
    %v246 = vsub.f32 %v45, %v245
    %247 = vmatpush1.xpose.msra.mxu0 %v246
    %248 = vmatprep.subr.mxu0 0.0
    %249 = vmatpush2.xpose.msra.mxu0 0.0
    %250 = vmatprep.subr.mxu0 0.0
    %251 = vmatpush2.xpose.msra.mxu0 0.0
    %252 = vmatprep.subr.mxu0 0.0
    %253 = vmatpush2.xpose.msra.mxu0 0.0
    %254 = vmatprep.subr.mxu0 0.0
    %255 = vmatpush2.xpose.msra.mxu0 0.0
    %256 = vmatprep.subr.mxu0 0.0
    %257 = vmatpush2.xpose.msra.mxu0 0.0
    %258 = vmatprep.subr.mxu0 0.0
    %259 = vmatpush2.xpose.msra.mxu0 0.0
    %260 = vmatprep.subr.mxu0 0.0
    %261 = vmatpush2.xpose.msra.mxu0 0.0
    %262 = vmatprep.subr.mxu0 0.0
    %263 = vmatpush2.xpose.msra.mxu0 0.0
    %264 = vmatprep.subr.mxu0 0.0
    %265 = vmatpush2.xpose.msra.mxu0 0.0
    %266 = vmatprep.subr.mxu0 0.0
    %267 = vmatpush2.xpose.msra.mxu0 0.0
    %268 = vmatprep.subr.mxu0 0.0
    %269 = vmatpush2.xpose.msra.mxu0 0.0
    %270 = vmatprep.subr.mxu0 0.0
    %271 = vmatpush2.xpose.msra.mxu0 0.0
    %272 = vmatprep.subr.mxu0 0.0
    %273 = vmatpush2.xpose.msra.mxu0 0.0
    %274 = vmatprep.subr.mxu0 0.0
    %275 = vmatpush2.xpose.msra.mxu0 0.0
    %276 = vmatprep.subr.mxu0 0.0
    %277 = vmatpush2.xpose.msra.mxu0 0.0
    %278 = vmatprep.subr.mxu0 0.0
    %279 = vmatpush2.xpose.msra.mxu0 0.0
    %v280 = vand.u32 %v46, 4294901760
    %v281 = vsub.f32 %v46, %v280
    %282 = vmatprep.mubr.f32.mxu0 %v281
    %v283 = vand.u32 %v45, 4294901760
    %v284 = vsub.f32 %v45, %v283
    %285 = vmatmul.mubr.f32.gmra.mxu0 %v284
    %v286 = vpop.f32.mrf.mxu0
    %v287 = vadd.f32 %v209, %v286
    %v288 = vpop.f32.mrf.mxu0
    %289 = vdwg.mxu0
    %290 = vmatprep.subr.mxu0 0.0
    %291 = vmatpush1.xpose.msra.mxu0 0.0
    %292 = vmatprep.subr.mxu0 0.0
    %293 = vmatpush1.xpose.msra.mxu0 0.0
    %294 = vmatprep.subr.mxu0 0.0
    %295 = vmatpush1.xpose.msra.mxu0 0.0
    %296 = vmatprep.subr.mxu0 0.0
    %297 = vmatpush1.xpose.msra.mxu0 0.0
    %298 = vmatprep.subr.mxu0 0.0
    %299 = vmatpush1.xpose.msra.mxu0 0.0
    %300 = vmatprep.subr.mxu0 0.0
    %301 = vmatpush1.xpose.msra.mxu0 0.0
    %302 = vmatprep.subr.mxu0 0.0
    %303 = vmatpush1.xpose.msra.mxu0 0.0
    %304 = vmatprep.subr.mxu0 0.0
    %305 = vmatpush1.xpose.msra.mxu0 0.0
    %306 = vmatprep.subr.mxu0 0.0
    %307 = vmatpush1.xpose.msra.mxu0 0.0
    %308 = vmatprep.subr.mxu0 0.0
    %309 = vmatpush1.xpose.msra.mxu0 0.0
    %310 = vmatprep.subr.mxu0 0.0
    %311 = vmatpush1.xpose.msra.mxu0 0.0
    %312 = vmatprep.subr.mxu0 0.0
    %313 = vmatpush1.xpose.msra.mxu0 0.0
    %314 = vmatprep.subr.mxu0 0.0
    %315 = vmatpush1.xpose.msra.mxu0 0.0
    %316 = vmatprep.subr.mxu0 0.0
    %317 = vmatpush1.xpose.msra.mxu0 0.0
    %318 = vmatprep.subr.mxu0 0.0
    %319 = vmatpush1.xpose.msra.mxu0 0.0
    %v320 = vand.u32 %v46, 4294901760
    %321 = vmatprep.subr.mxu0 %v320
    %v322 = vand.u32 %v45, 4294901760
    %323 = vmatpush1.xpose.msra.mxu0 %v322
    %324 = vmatprep.subr.mxu0 0.0
    %325 = vmatpush2.xpose.msra.mxu0 0.0
    %326 = vmatprep.subr.mxu0 0.0
    %327 = vmatpush2.xpose.msra.mxu0 0.0
    %328 = vmatprep.subr.mxu0 0.0
    %329 = vmatpush2.xpose.msra.mxu0 0.0
    %330 = vmatprep.subr.mxu0 0.0
    %331 = vmatpush2.xpose.msra.mxu0 0.0
    %332 = vmatprep.subr.mxu0 0.0
    %333 = vmatpush2.xpose.msra.mxu0 0.0
    %334 = vmatprep.subr.mxu0 0.0
    %335 = vmatpush2.xpose.msra.mxu0 0.0
    %336 = vmatprep.subr.mxu0 0.0
    %337 = vmatpush2.xpose.msra.mxu0 0.0
    %338 = vmatprep.subr.mxu0 0.0
    %339 = vmatpush2.xpose.msra.mxu0 0.0
    %340 = vmatprep.subr.mxu0 0.0
    %341 = vmatpush2.xpose.msra.mxu0 0.0
    %342 = vmatprep.subr.mxu0 0.0
    %343 = vmatpush2.xpose.msra.mxu0 0.0
    %344 = vmatprep.subr.mxu0 0.0
    %345 = vmatpush2.xpose.msra.mxu0 0.0
    %346 = vmatprep.subr.mxu0 0.0
    %347 = vmatpush2.xpose.msra.mxu0 0.0
    %348 = vmatprep.subr.mxu0 0.0
    %349 = vmatpush2.xpose.msra.mxu0 0.0
    %350 = vmatprep.subr.mxu0 0.0
    %351 = vmatpush2.xpose.msra.mxu0 0.0
    %352 = vmatprep.subr.mxu0 0.0
    %353 = vmatpush2.xpose.msra.mxu0 0.0
    %354 = vmatprep.subr.mxu0 0.0
    %355 = vmatpush2.xpose.msra.mxu0 0.0
    %v356 = vand.u32 %v46, 4294901760
    %v357 = vsub.f32 %v46, %v356
    %v358 = vand.u32 %v357, 4294901760
    %359 = vmatprep.mubr.f32.mxu0 %v358
    %v360 = vand.u32 %v45, 4294901760
    %v361 = vsub.f32 %v45, %v360
    %v362 = vand.u32 %v361, 4294901760
    %363 = vmatmul.mubr.f32.gmra.mxu0 %v362
    %v364 = vpop.f32.mrf.mxu0
    %v365 = vadd.f32 %v287, %v364
    %v366 = vpop.f32.mrf.mxu0
    %367 = vdwg.mxu0
    %368 = vmatprep.subr.mxu0 0.0
    %369 = vmatpush1.xpose.msra.mxu0 0.0
    %370 = vmatprep.subr.mxu0 0.0
    %371 = vmatpush1.xpose.msra.mxu0 0.0
    %372 = vmatprep.subr.mxu0 0.0
    %373 = vmatpush1.xpose.msra.mxu0 0.0
    %374 = vmatprep.subr.mxu0 0.0
    %375 = vmatpush1.xpose.msra.mxu0 0.0
    %376 = vmatprep.subr.mxu0 0.0
    %377 = vmatpush1.xpose.msra.mxu0 0.0
    %378 = vmatprep.subr.mxu0 0.0
    %379 = vmatpush1.xpose.msra.mxu0 0.0
    %380 = vmatprep.subr.mxu0 0.0
    %381 = vmatpush1.xpose.msra.mxu0 0.0
    %382 = vmatprep.subr.mxu0 0.0
    %383 = vmatpush1.xpose.msra.mxu0 0.0
    %384 = vmatprep.subr.mxu0 0.0
    %385 = vmatpush1.xpose.msra.mxu0 0.0
    %386 = vmatprep.subr.mxu0 0.0
    %387 = vmatpush1.xpose.msra.mxu0 0.0
    %388 = vmatprep.subr.mxu0 0.0
    %389 = vmatpush1.xpose.msra.mxu0 0.0
    %390 = vmatprep.subr.mxu0 0.0
    %391 = vmatpush1.xpose.msra.mxu0 0.0
    %392 = vmatprep.subr.mxu0 0.0
    %393 = vmatpush1.xpose.msra.mxu0 0.0
    %394 = vmatprep.subr.mxu0 0.0
    %395 = vmatpush1.xpose.msra.mxu0 0.0
    %396 = vmatprep.subr.mxu0 0.0
    %397 = vmatpush1.xpose.msra.mxu0 0.0
    %v398 = vand.u32 %v46, 4294901760
    %v399 = vsub.f32 %v46, %v398
    %v400 = vand.u32 %v399, 4294901760
    %401 = vmatprep.subr.mxu0 %v400
    %v402 = vand.u32 %v45, 4294901760
    %v403 = vsub.f32 %v45, %v402
    %v404 = vand.u32 %v403, 4294901760
    %405 = vmatpush1.xpose.msra.mxu0 %v404
    %406 = vmatprep.subr.mxu0 0.0
    %407 = vmatpush2.xpose.msra.mxu0 0.0
    %408 = vmatprep.subr.mxu0 0.0
    %409 = vmatpush2.xpose.msra.mxu0 0.0
    %410 = vmatprep.subr.mxu0 0.0
    %411 = vmatpush2.xpose.msra.mxu0 0.0
    %412 = vmatprep.subr.mxu0 0.0
    %413 = vmatpush2.xpose.msra.mxu0 0.0
    %414 = vmatprep.subr.mxu0 0.0
    %415 = vmatpush2.xpose.msra.mxu0 0.0
    %416 = vmatprep.subr.mxu0 0.0
    %417 = vmatpush2.xpose.msra.mxu0 0.0
    %418 = vmatprep.subr.mxu0 0.0
    %419 = vmatpush2.xpose.msra.mxu0 0.0
    %420 = vmatprep.subr.mxu0 0.0
    %421 = vmatpush2.xpose.msra.mxu0 0.0
    %422 = vmatprep.subr.mxu0 0.0
    %423 = vmatpush2.xpose.msra.mxu0 0.0
    %424 = vmatprep.subr.mxu0 0.0
    %425 = vmatpush2.xpose.msra.mxu0 0.0
    %426 = vmatprep.subr.mxu0 0.0
    %427 = vmatpush2.xpose.msra.mxu0 0.0
    %428 = vmatprep.subr.mxu0 0.0
    %429 = vmatpush2.xpose.msra.mxu0 0.0
    %430 = vmatprep.subr.mxu0 0.0
    %431 = vmatpush2.xpose.msra.mxu0 0.0
    %432 = vmatprep.subr.mxu0 0.0
    %433 = vmatpush2.xpose.msra.mxu0 0.0
    %434 = vmatprep.subr.mxu0 0.0
    %435 = vmatpush2.xpose.msra.mxu0 0.0
    %436 = vmatprep.subr.mxu0 0.0
    %437 = vmatpush2.xpose.msra.mxu0 0.0
    %v438 = vand.u32 %v46, 4294901760
    %439 = vmatprep.mubr.f32.mxu0 %v438
    %v440 = vand.u32 %v45, 4294901760
    %441 = vmatmul.mubr.f32.gmra.mxu0 %v440
    %v442 = vpop.f32.mrf.mxu0
    %v443 = vadd.f32 %v365, %v442
    %v444 = vpop.f32.mrf.mxu0
    %445 = vdwg.mxu0
    %446 = vmatprep.subr.mxu0 0.0
    %447 = vmatpush1.xpose.msra.mxu0 0.0
    %448 = vmatprep.subr.mxu0 0.0
    %449 = vmatpush1.xpose.msra.mxu0 0.0
    %450 = vmatprep.subr.mxu0 0.0
    %451 = vmatpush1.xpose.msra.mxu0 0.0
    %452 = vmatprep.subr.mxu0 0.0
    %453 = vmatpush1.xpose.msra.mxu0 0.0
    %454 = vmatprep.subr.mxu0 0.0
    %455 = vmatpush1.xpose.msra.mxu0 0.0
    %456 = vmatprep.subr.mxu0 0.0
    %457 = vmatpush1.xpose.msra.mxu0 0.0
    %458 = vmatprep.subr.mxu0 0.0
    %459 = vmatpush1.xpose.msra.mxu0 0.0
    %460 = vmatprep.subr.mxu0 0.0
    %461 = vmatpush1.xpose.msra.mxu0 0.0
    %462 = vmatprep.subr.mxu0 0.0
    %463 = vmatpush1.xpose.msra.mxu0 0.0
    %464 = vmatprep.subr.mxu0 0.0
    %465 = vmatpush1.xpose.msra.mxu0 0.0
    %466 = vmatprep.subr.mxu0 0.0
    %467 = vmatpush1.xpose.msra.mxu0 0.0
    %468 = vmatprep.subr.mxu0 0.0
    %469 = vmatpush1.xpose.msra.mxu0 0.0
    %470 = vmatprep.subr.mxu0 0.0
    %471 = vmatpush1.xpose.msra.mxu0 0.0
    %472 = vmatprep.subr.mxu0 0.0
    %473 = vmatpush1.xpose.msra.mxu0 0.0
    %474 = vmatprep.subr.mxu0 0.0
    %475 = vmatpush1.xpose.msra.mxu0 0.0
    %v476 = vand.u32 %v46, 4294901760
    %477 = vmatprep.subr.mxu0 %v476
    %v478 = vand.u32 %v45, 4294901760
    %479 = vmatpush1.xpose.msra.mxu0 %v478
    %480 = vmatprep.subr.mxu0 0.0
    %481 = vmatpush2.xpose.msra.mxu0 0.0
    %482 = vmatprep.subr.mxu0 0.0
    %483 = vmatpush2.xpose.msra.mxu0 0.0
    %484 = vmatprep.subr.mxu0 0.0
    %485 = vmatpush2.xpose.msra.mxu0 0.0
    %486 = vmatprep.subr.mxu0 0.0
    %487 = vmatpush2.xpose.msra.mxu0 0.0
    %488 = vmatprep.subr.mxu0 0.0
    %489 = vmatpush2.xpose.msra.mxu0 0.0
    %490 = vmatprep.subr.mxu0 0.0
    %491 = vmatpush2.xpose.msra.mxu0 0.0
    %492 = vmatprep.subr.mxu0 0.0
    %493 = vmatpush2.xpose.msra.mxu0 0.0
    %494 = vmatprep.subr.mxu0 0.0
    %495 = vmatpush2.xpose.msra.mxu0 0.0
    %496 = vmatprep.subr.mxu0 0.0
    %497 = vmatpush2.xpose.msra.mxu0 0.0
    %498 = vmatprep.subr.mxu0 0.0
    %499 = vmatpush2.xpose.msra.mxu0 0.0
    %500 = vmatprep.subr.mxu0 0.0
    %501 = vmatpush2.xpose.msra.mxu0 0.0
    %502 = vmatprep.subr.mxu0 0.0
    %503 = vmatpush2.xpose.msra.mxu0 0.0
    %504 = vmatprep.subr.mxu0 0.0
    %505 = vmatpush2.xpose.msra.mxu0 0.0
    %506 = vmatprep.subr.mxu0 0.0
    %507 = vmatpush2.xpose.msra.mxu0 0.0
    %508 = vmatprep.subr.mxu0 0.0
    %509 = vmatpush2.xpose.msra.mxu0 0.0
    %510 = vmatprep.subr.mxu0 0.0
    %511 = vmatpush2.xpose.msra.mxu0 0.0
    %v512 = vand.u32 %v46, 4294901760
    %513 = vmatprep.mubr.f32.mxu0 %v512
    %v514 = vand.u32 %v45, 4294901760
    %515 = vmatmul.mubr.f32.gmra.mxu0 %v514
    %v516 = vpop.f32.mrf.mxu0
    %v517 = vadd.f32 %v443, %v516
    %v518 = vpop.f32.mrf.mxu0
    %519 = vdwg.mxu0
    %v520 = vadd.f32 %v47, %v517
    %vm521 = vcmask 64512
    %522 = vst.msk [vmem:[#allocation2] sm:$0xff] %vm521, %v520
    // Predicated region
    $region22: #{tpu_custom_call.1} parent=1 // pred_check
      %p523 = pneg %p39
    $region23: #{tpu_custom_call.1} parent=1 // pred_check_branch
      %525 = sbr.rel (%p523) target = $region25
    $region24: #{tpu_custom_call.1} parent=1 // pred_region
      %v526 = vld [vmem:[#allocation2] sm:$0xff]
      %v527 = vmul.f32 %v526, 0.00048828125
      %528 = vst.msk [vmem:[#allocation8] sm:$0xff] %vm521, %v527
      %v529 = vld [vmem:[#allocation6] sm:$0xff]
      %v530 = vsub.f32 %v527, %v529
      %v531 = vmul.f32 %v530, %v530
      %v532 = vsel %vm521, %v531, 0.0
      %533 = vadd.xlane.f32.xlu0 %v532
      %v534 = vpop.xlane.xlu0 %533
      %v535 = vrot.slane %v534, 4
      %v536 = vadd.f32 %v534, %v535
      %v537 = vrot.slane %v536, 2
      %v538 = vadd.f32 %v536, %v537
      %v539 = vrot.slane %v538, 1
      %v540 = vadd.f32 %v538, %v539
      %s541 = vtos %v540
      %v542 = vstv %s541
      %v543 = vmul.f32 %v542, 0.015625
      %vm544 = vcmask 0
      %545 = vst.msk [vmem:[#allocation9] sm:$0x1] %vm544, %v543
    $region25: #{tpu_custom_call.1} parent=1 // pred_fallthru
      _
    // Predicated region
    $region26: #{tpu_custom_call.1} parent=1 // pred_check
      _
    $region27: #{tpu_custom_call.1} parent=1 // pred_check_branch
      %547 = sbr.rel (0) target = $region29
    $region28: #{tpu_custom_call.1} parent=1 // pred_region
      %s549 = ssub.s32 128, 128
      %550 = vsyncadd [#allocation5], %s549
      %s552 = sshll.u32 [#allocation8], 4
      %s553 = int_to_ptr.vmem [resolvable:$true] %s552
      %555 = dma.vmem_to_hbm [thread:$0]  %s553, 128, %s2, [#allocation5]
    $region29: #{tpu_custom_call.1} parent=1 // pred_fallthru
      _
    // Predicated region
    $region30: #{tpu_custom_call.1} parent=1 // pred_check
      _
    $region31: #{tpu_custom_call.1} parent=1 // pred_check_branch
      %557 = sbr.rel (0) target = $region33
    $region32: #{tpu_custom_call.1} parent=1 // pred_region
      %s559 = ssub.s32 16, 16
      %560 = vsyncadd [#allocation10], %s559
      %s562 = sshll.u32 [#allocation9], 4
      %s563 = int_to_ptr.vmem [resolvable:$true] %s562
      %565 = dma.vmem_to_hbm [thread:$0]  %s563, 16, %s3, [#allocation10]
    $region33: #{tpu_custom_call.1} parent=1 // pred_fallthru
      _
    // Predicated region
    $region34: #{tpu_custom_call.1} parent=1 // pred_check
      _
    $region35: #{tpu_custom_call.1} parent=1 // pred_check_branch
      %567 = sbr.rel (0) target = $region37
    $region36: #{tpu_custom_call.1} parent=1 // pred_region
      %568 = dma.done [#allocation5], 128
    $region37: #{tpu_custom_call.1} parent=1 // pred_fallthru
      _
    // Predicated region
    $region38: #{tpu_custom_call.1} parent=1 // pred_check
      _
    $region39: #{tpu_custom_call.1} parent=1 // pred_check_branch
      %570 = sbr.rel (0) target = $region41
    $region40: #{tpu_custom_call.1} parent=1 // pred_region
      %571 = dma.done [#allocation10], 16
    $region41: #{tpu_custom_call.1} parent=1 // pred_fallthru
      _
    %572 = vsyncpa [#allocation4], 1
    %573 = vsyncpa [#allocation7], 1
    %574 = vsyncpa [#allocation5], 1
    %575 = vsyncpa [#allocation10], 1

</llo_original>
